<compile_context>
chip_gen: v5e
topology: v5e:2x2
jax: 0.10.0
libtpu: 0.0.40
codegen_flags: <defaults>
</compile_context>

<pallas_src>
import functools

import jax
import jax.numpy as jnp
from jax.experimental import pallas as pl
from jax.experimental.pallas import tpu as pltpu

IN_DIM = 784
IN_PAD = 896      # 7 * 128: lane-aligned K for the layer-1 matmul
HID_DIM = 256
OUT_DIM = 10
OUT_PAD = 128     # lane-dense output slab; sliced back to 10 in the wrapper


def _round_up(n, m):
    return ((n + m - 1) // m) * m


def _uniform_bits(shape, seed_u32, salt, row_offset_u32):
    """Counter-based hash PRNG -> uint32 bits per element (portable: TPU + interpret).

    Each element's bits depend on (seed, global_row, col, salt) through a
    lowbias32-style mixer, so different batch tiles / layers get independent masks.
    """
    r = jax.lax.broadcasted_iota(jnp.int32, shape, 0).astype(jnp.uint32) + row_offset_u32
    c = jax.lax.broadcasted_iota(jnp.int32, shape, 1).astype(jnp.uint32)
    x = r * jnp.uint32(0x9E3779B9) + c
    x = x ^ (seed_u32 * jnp.uint32(0x85EBCA6B))
    x = x ^ jnp.uint32((salt * 0xC2B2AE35) & 0xFFFFFFFF)
    # lowbias32 finalizer
    x = x ^ (x >> 16)
    x = x * jnp.uint32(0x7FEB352D)
    x = x ^ (x >> 15)
    x = x * jnp.uint32(0x846CA68B)
    x = x ^ (x >> 16)
    return x


def _dropout(h, p_drop, seed_u32, salt, row_offset_u32):
    """torch-style dropout: keep with prob 1-p, scale kept values by 1/(1-p)."""
    if p_drop <= 0.0:
        return h
    if p_drop >= 1.0:
        return jnp.zeros_like(h)
    threshold = jnp.uint32(min(int(p_drop * 4294967296.0), 4294967295))
    bits = _uniform_bits(h.shape, seed_u32, salt, row_offset_u32)
    keep = bits >= threshold                      # P(keep) = 1 - p
    return jnp.where(keep, h * (1.0 / (1.0 - p_drop)), 0.0)


def _mlp_kernel(seed_ref,                                           # scalar prefetch (SMEM)
                x_ref, w1_ref, b1_ref, w2_ref, b2_ref, w3_ref, b3_ref,  # inputs
                o_ref,                                              # output
                *, is_train, tile_b):
    seed_u32 = seed_ref[0].astype(jnp.uint32)
    row_off = (pl.program_id(0) * tile_b).astype(jnp.uint32)        # global row offset

    x = x_ref[...]                                                  # bf16 (tile_b, 896)

    # Layer 1: Linear(784->256) + ReLU (+ dropout p=0.2 if training)
    h1 = jnp.dot(x, w1_ref[...], preferred_element_type=jnp.float32) + b1_ref[...]
    h1 = jnp.maximum(h1, 0.0)                                       # f32 elementwise
    if is_train:
        h1 = _dropout(h1, 0.2, seed_u32, 1, row_off)

    # Layer 2: Linear(256->256) + ReLU (+ dropout p=0.5 if training)
    h2 = jnp.dot(h1.astype(w2_ref.dtype), w2_ref[...],
                 preferred_element_type=jnp.float32) + b2_ref[...]
    h2 = jnp.maximum(h2, 0.0)
    if is_train:
        h2 = _dropout(h2, 0.5, seed_u32, 2, row_off)

    # Layer 3: Linear(256->10), written to a lane-dense 128-wide slab
    o_ref[...] = (jnp.dot(h2.astype(w3_ref.dtype), w3_ref[...],
                          preferred_element_type=jnp.float32)
                  + b3_ref[...]).astype(o_ref.dtype)


def mlp_forward(x, params, seed=0, is_train=True, tile_b=512,
                compute_dtype=jnp.bfloat16):
    """Fused MLP forward. x: (B, 784) float32. Returns (B, 10) float32."""
    w1, b1, w2, b2, w3, b3 = params
    B = x.shape[0]

    # Batch tile: big for MXU occupancy, shrunk for tiny batches; pad the remainder.
    tile_b = min(tile_b, _round_up(B, 8))
    B_pad = _round_up(B, tile_b)

    # Lane-aligned padding: batch -> B_pad, features 784 -> 896, out cols 10 -> 128.
    x_p = jnp.pad(x, ((0, B_pad - B), (0, IN_PAD - IN_DIM))).astype(compute_dtype)
    w1_p = jnp.pad(w1, ((0, IN_PAD - IN_DIM), (0, 0))).astype(compute_dtype)
    w2_p = w2.astype(compute_dtype)
    w3_p = jnp.pad(w3, ((0, 0), (0, OUT_PAD - OUT_DIM))).astype(compute_dtype)
    b1_p = b1.astype(jnp.float32)
    b2_p = b2.astype(jnp.float32)
    b3_p = jnp.pad(b3, ((0, 0), (0, OUT_PAD - OUT_DIM))).astype(jnp.float32)

    seed_arr = jnp.asarray([seed], dtype=jnp.int32)
    kernel = functools.partial(_mlp_kernel, is_train=is_train, tile_b=tile_b)

    grid_spec = pltpu.PrefetchScalarGridSpec(
        num_scalar_prefetch=1,
        grid=(B_pad // tile_b,),
        in_specs=[
            pl.BlockSpec((tile_b, IN_PAD), lambda i, s: (i, 0)),    # x tile (streamed)
            pl.BlockSpec((IN_PAD, HID_DIM), lambda i, s: (0, 0)),   # w1 (resident)
            pl.BlockSpec((1, HID_DIM), lambda i, s: (0, 0)),        # b1
            pl.BlockSpec((HID_DIM, HID_DIM), lambda i, s: (0, 0)),  # w2 (resident)
            pl.BlockSpec((1, HID_DIM), lambda i, s: (0, 0)),        # b2
            pl.BlockSpec((HID_DIM, OUT_PAD), lambda i, s: (0, 0)),  # w3 (resident)
            pl.BlockSpec((1, OUT_PAD), lambda i, s: (0, 0)),        # b3
        ],
        out_specs=pl.BlockSpec((tile_b, OUT_PAD), lambda i, s: (i, 0)),
    )

    itemsize = jnp.dtype(compute_dtype).itemsize
    flops = 2 * B_pad * (IN_PAD * HID_DIM + HID_DIM * HID_DIM + HID_DIM * OUT_PAD)
    bytes_accessed = (B_pad * IN_PAD * itemsize
                      + (IN_PAD * HID_DIM + HID_DIM * HID_DIM + HID_DIM * OUT_PAD) * itemsize
                      + (2 * HID_DIM + OUT_PAD) * 4
                      + B_pad * OUT_PAD * 4)

    out = pl.pallas_call(
        kernel,
        out_shape=jax.ShapeDtypeStruct((B_pad, OUT_PAD), jnp.float32),
        grid_spec=grid_spec,
        compiler_params=pltpu.CompilerParams(
            dimension_semantics=("parallel",)),          # batch tiles are independent
        cost_estimate=pl.CostEstimate(
            flops=flops, transcendentals=0, bytes_accessed=bytes_accessed),
    )(seed_arr, x_p, w1_p, b1_p, w2_p, b2_p, w3_p, b3_p)

    return out[:B, :OUT_DIM]


def init_params(key):
    """Deterministic init mimicking nn.Linear default (uniform +-1/sqrt(fan_in))."""
    k1, k2, k3, k4, k5, k6 = jax.random.split(key, 6)

    def lin(kw, kb, fan_in, fan_out):
        bound = 1.0 / jnp.sqrt(fan_in)
        w = jax.random.uniform(kw, (fan_in, fan_out), jnp.float32, -bound, bound)
        b = jax.random.uniform(kb, (1, fan_out), jnp.float32, -bound, bound)
        return w, b

    w1, b1 = lin(k1, k2, IN_DIM, HID_DIM)
    w2, b2 = lin(k3, k4, HID_DIM, HID_DIM)
    w3, b3 = lin(k5, k6, HID_DIM, OUT_DIM)
    return (w1, b1, w2, b2, w3, b3)


if __name__ == "__main__":
    key = jax.random.PRNGKey(0)
    pkey, xkey = jax.random.split(key)
    params = init_params(pkey)

    B = 8
    x = jax.random.normal(xkey, (B, IN_DIM), jnp.float32)

    # Training-mode forward (dropout in-kernel)
    out_train = mlp_forward(x, params, seed=42, is_train=True)
    jax.block_until_ready(out_train)

    # Eval-mode forward (no dropout)
    out_eval = mlp_forward(x, params, seed=0, is_train=False)
    jax.block_until_ready(out_eval)

    # Pure-JAX reference using the same bf16-matmul / f32-accumulate recipe
    w1, b1, w2, b2, w3, b3 = params
    cd = jnp.bfloat16
    h1 = jnp.maximum(jnp.dot(x.astype(cd), w1.astype(cd),
                             preferred_element_type=jnp.float32) + b1, 0.0)
    h2 = jnp.maximum(jnp.dot(h1.astype(cd), w2.astype(cd),
                             preferred_element_type=jnp.float32) + b2, 0.0)
    ref = jnp.dot(h2.astype(cd), w3.astype(cd),
                  preferred_element_type=jnp.float32) + b3

    assert out_train.shape == (B, OUT_DIM)
    assert out_eval.shape == (B, OUT_DIM)
    assert bool(jnp.all(jnp.isfinite(out_train)))
    assert jnp.allclose(out_eval, ref, atol=2e-2, rtol=2e-2), "eval-mode mismatch vs reference"
    # dropout should perturb the training-mode output
    assert not jnp.allclose(out_train, out_eval, atol=1e-6)

    print("KERNEL_OK")
</pallas_src>

<mosaic_0001>
module attributes {stable_mosaic.version = 11 : i64} {
  func.func @_mlp_kernel(%arg0: i32, %arg1: memref<1xi32, #tpu.memory_space<smem>>, %arg2: memref<8x896xbf16, #tpu.memory_space<vmem>>, %arg3: memref<896x256xbf16, #tpu.memory_space<vmem>>, %arg4: memref<1x256xf32, #tpu.memory_space<vmem>>, %arg5: memref<256x256xbf16, #tpu.memory_space<vmem>>, %arg6: memref<1x256xf32, #tpu.memory_space<vmem>>, %arg7: memref<256x128xbf16, #tpu.memory_space<vmem>>, %arg8: memref<1x128xf32, #tpu.memory_space<vmem>>, %arg9: memref<8x128xf32, #tpu.memory_space<vmem>>) attributes {dimension_semantics = [#tpu.dimension_semantics<parallel>], iteration_bounds = array<i64: 1>, scalar_prefetch = 1 : i64, scratch_operands = 0 : i64, tpu.core_type = #tpu.core_type<tc>, window_params = [{transform_indices = @transform_0, window_bounds = array<i64: 8, 896>}, {pipeline_mode = #tpu.pipeline_mode<synchronous>, transform_indices = @transform_1, window_bounds = array<i64: 896, 256>}, {pipeline_mode = #tpu.pipeline_mode<synchronous>, transform_indices = @transform_2, window_bounds = array<i64: 1, 256>}, {pipeline_mode = #tpu.pipeline_mode<synchronous>, transform_indices = @transform_3, window_bounds = array<i64: 256, 256>}, {pipeline_mode = #tpu.pipeline_mode<synchronous>, transform_indices = @transform_4, window_bounds = array<i64: 1, 256>}, {pipeline_mode = #tpu.pipeline_mode<synchronous>, transform_indices = @transform_5, window_bounds = array<i64: 256, 128>}, {pipeline_mode = #tpu.pipeline_mode<synchronous>, transform_indices = @transform_6, window_bounds = array<i64: 1, 128>}, {transform_indices = @transform_7, window_bounds = array<i64: 8, 128>}]} {
    %c0 = arith.constant 0 : index
    %0 = memref.load %arg1[%c0] : memref<1xi32, #tpu.memory_space<smem>>
    %c8_i32 = arith.constant 8 : i32
    %1 = arith.muli %arg0, %c8_i32 : i32
    %c0_0 = arith.constant 0 : index
    %c0_1 = arith.constant 0 : index
    %2 = vector.load %arg2[%c0_0, %c0_1] : memref<8x896xbf16, #tpu.memory_space<vmem>>, vector<8x896xbf16>
    %c0_2 = arith.constant 0 : index
    %c0_3 = arith.constant 0 : index
    %3 = vector.load %arg3[%c0_2, %c0_3] : memref<896x256xbf16, #tpu.memory_space<vmem>>, vector<896x256xbf16>
    %cst = arith.constant dense<0.000000e+00> : vector<8x256xf32>
    %4 = tpu.matmul %2, %3, %cst {dimension_numbers = #tpu.dot_dimension_numbers<[1], [0], [0], [1], [0, 0, 1, 1], [], []>} : vector<8x896xbf16>, vector<896x256xbf16>, vector<8x256xf32> -> vector<8x256xf32>
    %c0_4 = arith.constant 0 : index
    %c0_5 = arith.constant 0 : index
    %5 = vector.load %arg4[%c0_4, %c0_5] : memref<1x256xf32, #tpu.memory_space<vmem>>, vector<1x256xf32>
    %6 = vector.broadcast %5 : vector<1x256xf32> to vector<8x256xf32>
    %7 = arith.addf %4, %6 : vector<8x256xf32>
    %cst_6 = arith.constant 0.000000e+00 : f32
    %8 = vector.broadcast %cst_6 : f32 to vector<8x256xf32>
    %9 = arith.maximumf %7, %8 : vector<8x256xf32>
    %10 = tpu.iota {dimensions = array<i32: 0>} : vector<8x256xi32>
    %11 = vector.broadcast %1 : i32 to vector<8x256xi32>
    %12 = arith.addi %10, %11 : vector<8x256xi32>
    %13 = tpu.iota {dimensions = array<i32: 1>} : vector<8x256xi32>
    %c-1640531527_i32 = arith.constant -1640531527 : i32
    %14 = vector.broadcast %c-1640531527_i32 : i32 to vector<8x256xi32>
    %15 = arith.muli %12, %14 : vector<8x256xi32>
    %16 = arith.addi %15, %13 : vector<8x256xi32>
    %c-2048144789_i32 = arith.constant -2048144789 : i32
    %17 = arith.muli %0, %c-2048144789_i32 : i32
    %18 = vector.broadcast %17 : i32 to vector<8x256xi32>
    %19 = arith.xori %16, %18 : vector<8x256xi32>
    %c-1028477387_i32 = arith.constant -1028477387 : i32
    %20 = vector.broadcast %c-1028477387_i32 : i32 to vector<8x256xi32>
    %21 = arith.xori %19, %20 : vector<8x256xi32>
    %c16_i32 = arith.constant 16 : i32
    %22 = vector.broadcast %c16_i32 : i32 to vector<8x256xi32>
    %23 = arith.shrui %21, %22 : vector<8x256xi32>
    %24 = arith.xori %21, %23 : vector<8x256xi32>
    %c2146121005_i32 = arith.constant 2146121005 : i32
    %25 = vector.broadcast %c2146121005_i32 : i32 to vector<8x256xi32>
    %26 = arith.muli %24, %25 : vector<8x256xi32>
    %c15_i32 = arith.constant 15 : i32
    %27 = vector.broadcast %c15_i32 : i32 to vector<8x256xi32>
    %28 = arith.shrui %26, %27 : vector<8x256xi32>
    %29 = arith.xori %26, %28 : vector<8x256xi32>
    %c-2073254261_i32 = arith.constant -2073254261 : i32
    %30 = vector.broadcast %c-2073254261_i32 : i32 to vector<8x256xi32>
    %31 = arith.muli %29, %30 : vector<8x256xi32>
    %c16_i32_7 = arith.constant 16 : i32
    %32 = vector.broadcast %c16_i32_7 : i32 to vector<8x256xi32>
    %33 = arith.shrui %31, %32 : vector<8x256xi32>
    %34 = arith.xori %31, %33 : vector<8x256xi32>
    %c858993459_i32 = arith.constant 858993459 : i32
    %35 = vector.broadcast %c858993459_i32 : i32 to vector<8x256xi32>
    %36 = arith.cmpi uge, %34, %35 : vector<8x256xi32>
    %cst_8 = arith.constant 1.250000e+00 : f32
    %37 = vector.broadcast %cst_8 : f32 to vector<8x256xf32>
    %38 = arith.mulf %9, %37 : vector<8x256xf32>
    %cst_9 = arith.constant 0.000000e+00 : f32
    %39 = vector.broadcast %cst_9 : f32 to vector<8x256xf32>
    %40 = arith.select %36, %38, %39 : vector<8x256xi1>, vector<8x256xf32>
    %41 = arith.truncf %40 : vector<8x256xf32> to vector<8x256xbf16>
    %c0_10 = arith.constant 0 : index
    %c0_11 = arith.constant 0 : index
    %42 = vector.load %arg5[%c0_10, %c0_11] : memref<256x256xbf16, #tpu.memory_space<vmem>>, vector<256x256xbf16>
    %cst_12 = arith.constant dense<0.000000e+00> : vector<8x256xf32>
    %43 = tpu.matmul %41, %42, %cst_12 {dimension_numbers = #tpu.dot_dimension_numbers<[1], [0], [0], [1], [0, 0, 1, 1], [], []>} : vector<8x256xbf16>, vector<256x256xbf16>, vector<8x256xf32> -> vector<8x256xf32>
    %c0_13 = arith.constant 0 : index
    %c0_14 = arith.constant 0 : index
    %44 = vector.load %arg6[%c0_13, %c0_14] : memref<1x256xf32, #tpu.memory_space<vmem>>, vector<1x256xf32>
    %45 = vector.broadcast %44 : vector<1x256xf32> to vector<8x256xf32>
    %46 = arith.addf %43, %45 : vector<8x256xf32>
    %cst_15 = arith.constant 0.000000e+00 : f32
    %47 = vector.broadcast %cst_15 : f32 to vector<8x256xf32>
    %48 = arith.maximumf %46, %47 : vector<8x256xf32>
    %49 = tpu.iota {dimensions = array<i32: 0>} : vector<8x256xi32>
    %50 = vector.broadcast %1 : i32 to vector<8x256xi32>
    %51 = arith.addi %49, %50 : vector<8x256xi32>
    %52 = tpu.iota {dimensions = array<i32: 1>} : vector<8x256xi32>
    %c-1640531527_i32_16 = arith.constant -1640531527 : i32
    %53 = vector.broadcast %c-1640531527_i32_16 : i32 to vector<8x256xi32>
    %54 = arith.muli %51, %53 : vector<8x256xi32>
    %55 = arith.addi %54, %52 : vector<8x256xi32>
    %c-2048144789_i32_17 = arith.constant -2048144789 : i32
    %56 = arith.muli %0, %c-2048144789_i32_17 : i32
    %57 = vector.broadcast %56 : i32 to vector<8x256xi32>
    %58 = arith.xori %55, %57 : vector<8x256xi32>
    %c-2056954774_i32 = arith.constant -2056954774 : i32
    %59 = vector.broadcast %c-2056954774_i32 : i32 to vector<8x256xi32>
    %60 = arith.xori %58, %59 : vector<8x256xi32>
    %c16_i32_18 = arith.constant 16 : i32
    %61 = vector.broadcast %c16_i32_18 : i32 to vector<8x256xi32>
    %62 = arith.shrui %60, %61 : vector<8x256xi32>
    %63 = arith.xori %60, %62 : vector<8x256xi32>
    %c2146121005_i32_19 = arith.constant 2146121005 : i32
    %64 = vector.broadcast %c2146121005_i32_19 : i32 to vector<8x256xi32>
    %65 = arith.muli %63, %64 : vector<8x256xi32>
    %c15_i32_20 = arith.constant 15 : i32
    %66 = vector.broadcast %c15_i32_20 : i32 to vector<8x256xi32>
    %67 = arith.shrui %65, %66 : vector<8x256xi32>
    %68 = arith.xori %65, %67 : vector<8x256xi32>
    %c-2073254261_i32_21 = arith.constant -2073254261 : i32
    %69 = vector.broadcast %c-2073254261_i32_21 : i32 to vector<8x256xi32>
    %70 = arith.muli %68, %69 : vector<8x256xi32>
    %c16_i32_22 = arith.constant 16 : i32
    %71 = vector.broadcast %c16_i32_22 : i32 to vector<8x256xi32>
    %72 = arith.shrui %70, %71 : vector<8x256xi32>
    %73 = arith.xori %70, %72 : vector<8x256xi32>
    %c-2147483648_i32 = arith.constant -2147483648 : i32
    %74 = vector.broadcast %c-2147483648_i32 : i32 to vector<8x256xi32>
    %75 = arith.cmpi uge, %73, %74 : vector<8x256xi32>
    %cst_23 = arith.constant 2.000000e+00 : f32
    %76 = vector.broadcast %cst_23 : f32 to vector<8x256xf32>
    %77 = arith.mulf %48, %76 : vector<8x256xf32>
    %cst_24 = arith.constant 0.000000e+00 : f32
    %78 = vector.broadcast %cst_24 : f32 to vector<8x256xf32>
    %79 = arith.select %75, %77, %78 : vector<8x256xi1>, vector<8x256xf32>
    %80 = arith.truncf %79 : vector<8x256xf32> to vector<8x256xbf16>
    %c0_25 = arith.constant 0 : index
    %c0_26 = arith.constant 0 : index
    %81 = vector.load %arg7[%c0_25, %c0_26] : memref<256x128xbf16, #tpu.memory_space<vmem>>, vector<256x128xbf16>
    %cst_27 = arith.constant dense<0.000000e+00> : vector<8x128xf32>
    %82 = tpu.matmul %80, %81, %cst_27 {dimension_numbers = #tpu.dot_dimension_numbers<[1], [0], [0], [1], [0, 0, 1, 1], [], []>} : vector<8x256xbf16>, vector<256x128xbf16>, vector<8x128xf32> -> vector<8x128xf32>
    %c0_28 = arith.constant 0 : index
    %c0_29 = arith.constant 0 : index
    %83 = vector.load %arg8[%c0_28, %c0_29] : memref<1x128xf32, #tpu.memory_space<vmem>>, vector<1x128xf32>
    %84 = vector.broadcast %83 : vector<1x128xf32> to vector<8x128xf32>
    %85 = arith.addf %82, %84 : vector<8x128xf32>
    %c0_30 = arith.constant 0 : index
    %c0_31 = arith.constant 0 : index
    %86 = vector.load %arg9[%c0_30, %c0_31] : memref<8x128xf32, #tpu.memory_space<vmem>>, vector<8x128xf32>
    tpu.vector_store %arg9[%c0_30, %c0_31], %85 {strides = array<i32>} : memref<8x128xf32, #tpu.memory_space<vmem>>, vector<8x128xf32>,
    return
  }
  func.func @transform_0(%arg0: i32, %arg1: memref<1xi32, #tpu.memory_space<smem>>) -> (i32, i32) {
    %c0_i32 = arith.constant 0 : i32
    %c0_i32_0 = arith.constant 0 : i32
    return %arg0, %c0_i32 : i32, i32
  }
  func.func @transform_1(%arg0: i32, %arg1: memref<1xi32, #tpu.memory_space<smem>>) -> (i32, i32) {
    %c0_i32 = arith.constant 0 : i32
    %c0_i32_0 = arith.constant 0 : i32
    %c0_i32_1 = arith.constant 0 : i32
    return %c0_i32, %c0_i32_0 : i32, i32
  }
  func.func @transform_2(%arg0: i32, %arg1: memref<1xi32, #tpu.memory_space<smem>>) -> (i32, i32) {
    %c0_i32 = arith.constant 0 : i32
    %c0_i32_0 = arith.constant 0 : i32
    %c0_i32_1 = arith.constant 0 : i32
    return %c0_i32, %c0_i32_0 : i32, i32
  }
  func.func @transform_3(%arg0: i32, %arg1: memref<1xi32, #tpu.memory_space<smem>>) -> (i32, i32) {
    %c0_i32 = arith.constant 0 : i32
    %c0_i32_0 = arith.constant 0 : i32
    %c0_i32_1 = arith.constant 0 : i32
    return %c0_i32, %c0_i32_0 : i32, i32
  }
  func.func @transform_4(%arg0: i32, %arg1: memref<1xi32, #tpu.memory_space<smem>>) -> (i32, i32) {
    %c0_i32 = arith.constant 0 : i32
    %c0_i32_0 = arith.constant 0 : i32
    %c0_i32_1 = arith.constant 0 : i32
    return %c0_i32, %c0_i32_0 : i32, i32
  }
  func.func @transform_5(%arg0: i32, %arg1: memref<1xi32, #tpu.memory_space<smem>>) -> (i32, i32) {
    %c0_i32 = arith.constant 0 : i32
    %c0_i32_0 = arith.constant 0 : i32
    %c0_i32_1 = arith.constant 0 : i32
    return %c0_i32, %c0_i32_0 : i32, i32
  }
  func.func @transform_6(%arg0: i32, %arg1: memref<1xi32, #tpu.memory_space<smem>>) -> (i32, i32) {
    %c0_i32 = arith.constant 0 : i32
    %c0_i32_0 = arith.constant 0 : i32
    %c0_i32_1 = arith.constant 0 : i32
    return %c0_i32, %c0_i32_0 : i32, i32
  }
  func.func @transform_7(%arg0: i32, %arg1: memref<1xi32, #tpu.memory_space<smem>>) -> (i32, i32) {
    %c0_i32 = arith.constant 0 : i32
    %c0_i32_0 = arith.constant 0 : i32
    return %arg0, %c0_i32 : i32, i32
  }
}

</mosaic_0001>

<llo_original>
// kernel: tpu_custom_call.1
$region0: #{tpu_custom_call.1}
  #allocation0 [shape = 'u32[]', space=smem, size = 0x4, offset = 0x4, fixed_abs, tag = 'smem constant byte address 0x4 - core index']
  #allocation1 [shape = 'u32[72,128]{1,0:T(1,128)}', space=vmem, size = 0x9000, scoped, tag = 'internal scratch']
  #allocation2 [shape = 's32[1]{0}', space=sflag, size = 0x4, scoped, tag = 'scoped memory for tpu_custom_call.1']
  #allocation3 [shape = 's32[1]{0:T(128)S(6)}', space=smem, size = 0x200, scoped, tag = 'prefetched SMEM operand 0']
  %s0 = inlined_call_operand.<no memory space> [shape: s32[1], index: 0, kind: input, shape index: {}]
  %s1 = inlined_call_operand.hbm [shape: bf16[8,896], index: 1, kind: input, shape index: {}]
  %s2 = inlined_call_operand.hbm [shape: bf16[896,256], index: 2, kind: input, shape index: {}]
  %s3 = inlined_call_operand.vmem [shape: f32[1,256], index: 3, kind: input, shape index: {}]
  %s4 = inlined_call_operand.hbm [shape: bf16[256,256], index: 4, kind: input, shape index: {}]
  %s5 = inlined_call_operand.vmem [shape: f32[1,256], index: 5, kind: input, shape index: {}]
  %s6 = inlined_call_operand.hbm [shape: bf16[256,128], index: 6, kind: input, shape index: {}]
  %s7 = inlined_call_operand.vmem [shape: f32[1,128], index: 7, kind: input, shape index: {}]
  %s8 = inlined_call_operand.hbm [shape: f32[8,128], index: 8, kind: output, shape index: {}]
  %s9 = sld [smem:[#allocation0]]
  $region54: #{tpu_custom_call.1} parent=0
    _
  %s11 = ssub.s32 1, %s9
  %s12 = scalar_select 0, %s11, %s9
  %13 = sst [smem:[#allocation3]] %s0
  $region1: #{tpu_custom_call.1} parent=0
    #allocation4 [shape = 'u8[14336]{0}', space=vmem, size = 0x3800, scoped, tag = 'input window, operand 1, single buffered']
    #allocation5 [shape = 's32[1]{0}', space=sflag, size = 0x4, scoped, tag = 'scoped memory for tpu_custom_call.1']
    #allocation6 [shape = 's32[1]{0}', space=sflag, size = 0x4, scoped, tag = 'scoped memory for tpu_custom_call.1']
    #allocation7 [shape = 'u8[458752]{0}', space=vmem, size = 0x70000, scoped, tag = 'input window, operand 2, single buffered']
    #allocation8 [shape = 's32[1]{0}', space=sflag, size = 0x4, scoped, tag = 'scoped memory for tpu_custom_call.1']
    #allocation9 [shape = 'u8[131072]{0}', space=vmem, size = 0x20000, scoped, tag = 'input window, operand 4, single buffered']
    #allocation10 [shape = 'u8[65536]{0}', space=vmem, size = 0x10000, scoped, tag = 'input window, operand 6, single buffered']
    #allocation11 [shape = 's32[1]{0}', space=sflag, size = 0x4, scoped, tag = 'scoped memory for tpu_custom_call.1']
    #allocation12 [shape = 'u8[4096]{0}', space=vmem, size = 0x1000, scoped, tag = 'output window, operand 0, single buffered']
    %14 = vsyncpa [#allocation5], 0
    %15 = vsyncpa [#allocation8], 0
    %16 = vsyncpa [#allocation11], 0
    %17 = vsyncpa [#allocation6], 0
    // Predicated region
    $region2: #{tpu_custom_call.1} parent=1 // pred_check
      _
    $region3: #{tpu_custom_call.1} parent=1 // pred_check_branch
      %19 = sbr.rel (0) target = $region5
    $region4: #{tpu_custom_call.1} parent=1 // pred_region
      %21 = vsyncadd [#allocation5], 0
      %s23 = sshll.u32 %s1, 4
      %s24 = int_to_ptr.hbm [resolvable:$true] %s23
      %s25 = sshll.u32 [#allocation4], 4
      %s26 = int_to_ptr.vmem [resolvable:$true] %s25
      %28 = dma.hbm_to_vmem [thread:$0]  %s24, 448, %s26, [#allocation5]
    $region5: #{tpu_custom_call.1} parent=1 // pred_fallthru
      _
    // Predicated region
    $region6: #{tpu_custom_call.1} parent=1 // pred_check
      _
    $region7: #{tpu_custom_call.1} parent=1 // pred_check_branch
      %30 = sbr.rel (0) target = $region9
    $region8: #{tpu_custom_call.1} parent=1 // pred_region
      %32 = vsyncadd [#allocation8], 0
      %s33 = sshll.u32 %s2, 4
      %s34 = int_to_ptr.hbm [resolvable:$true] %s33
      %s35 = sshll.u32 [#allocation7], 4
      %s36 = int_to_ptr.vmem [resolvable:$true] %s35
      %41 = dma.hbm_to_vmem [thread:$0]  %s34, 14336, %s36, [#allocation8], 128, 128, 8
    $region9: #{tpu_custom_call.1} parent=1 // pred_fallthru
      _
    // Predicated region
    $region10: #{tpu_custom_call.1} parent=1 // pred_check
      _
    $region11: #{tpu_custom_call.1} parent=1 // pred_check_branch
      %43 = sbr.rel (0) target = $region13
    $region12: #{tpu_custom_call.1} parent=1 // pred_region
      _
    $region13: #{tpu_custom_call.1} parent=1 // pred_fallthru
      _
    // Predicated region
    $region14: #{tpu_custom_call.1} parent=1 // pred_check
      _
    $region15: #{tpu_custom_call.1} parent=1 // pred_check_branch
      %45 = sbr.rel (0) target = $region17
    $region16: #{tpu_custom_call.1} parent=1 // pred_region
      %47 = vsyncadd [#allocation8], 0
      %s48 = sshll.u32 %s4, 4
      %s49 = int_to_ptr.hbm [resolvable:$true] %s48
      %s50 = sshll.u32 [#allocation9], 4
      %s51 = int_to_ptr.vmem [resolvable:$true] %s50
      %56 = dma.hbm_to_vmem [thread:$0]  %s49, 4096, %s51, [#allocation8], 128, 128, 8
    $region17: #{tpu_custom_call.1} parent=1 // pred_fallthru
      _
    // Predicated region
    $region18: #{tpu_custom_call.1} parent=1 // pred_check
      _
    $region19: #{tpu_custom_call.1} parent=1 // pred_check_branch
      %58 = sbr.rel (0) target = $region21
    $region20: #{tpu_custom_call.1} parent=1 // pred_region
      _
    $region21: #{tpu_custom_call.1} parent=1 // pred_fallthru
      _
    // Predicated region
    $region22: #{tpu_custom_call.1} parent=1 // pred_check
      _
    $region23: #{tpu_custom_call.1} parent=1 // pred_check_branch
      %60 = sbr.rel (0) target = $region25
    $region24: #{tpu_custom_call.1} parent=1 // pred_region
      %62 = vsyncadd [#allocation11], 0
      %s63 = sshll.u32 %s6, 4
      %s64 = int_to_ptr.hbm [resolvable:$true] %s63
      %s65 = sshll.u32 [#allocation10], 4
      %s66 = int_to_ptr.vmem [resolvable:$true] %s65
      %71 = dma.hbm_to_vmem [thread:$0]  %s64, 2048, %s66, [#allocation11], 64, 64, 4
    $region25: #{tpu_custom_call.1} parent=1 // pred_fallthru
      _
    // Predicated region
    $region26: #{tpu_custom_call.1} parent=1 // pred_check
      _
    $region27: #{tpu_custom_call.1} parent=1 // pred_check_branch
      %73 = sbr.rel (0) target = $region29
    $region28: #{tpu_custom_call.1} parent=1 // pred_region
      _
    $region29: #{tpu_custom_call.1} parent=1 // pred_fallthru
      _
    // Predicated region
    $region30: #{tpu_custom_call.1} parent=1 // pred_check
      _
    $region31: #{tpu_custom_call.1} parent=1 // pred_check_branch
      %75 = sbr.rel (0) target = $region33
    $region32: #{tpu_custom_call.1} parent=1 // pred_region
      %77 = dma.done [#allocation5], 448
    $region33: #{tpu_custom_call.1} parent=1 // pred_fallthru
      _
    // Predicated region
    $region34: #{tpu_custom_call.1} parent=1 // pred_check
      _
    $region35: #{tpu_custom_call.1} parent=1 // pred_check_branch
      %79 = sbr.rel (0) target = $region37
    $region36: #{tpu_custom_call.1} parent=1 // pred_region
      %81 = dma.done [#allocation8], 14336
    $region37: #{tpu_custom_call.1} parent=1 // pred_fallthru
      _
    // Predicated region
    $region38: #{tpu_custom_call.1} parent=1 // pred_check
      _
    $region39: #{tpu_custom_call.1} parent=1 // pred_check_branch
      %83 = sbr.rel (0) target = $region41
    $region40: #{tpu_custom_call.1} parent=1 // pred_region
      %85 = dma.done [#allocation8], 4096
    $region41: #{tpu_custom_call.1} parent=1 // pred_fallthru
      _
    // Predicated region
    $region42: #{tpu_custom_call.1} parent=1 // pred_check
      _
    $region43: #{tpu_custom_call.1} parent=1 // pred_check_branch
      %87 = sbr.rel (0) target = $region45
    $region44: #{tpu_custom_call.1} parent=1 // pred_region
      %89 = dma.done [#allocation11], 2048
    $region45: #{tpu_custom_call.1} parent=1 // pred_fallthru
      _
    %s90 = sld [smem:[#allocation3]]
    %s91 = smul.u32 0, 8
    %v92 = vld [vmem:[#allocation4] sm:$0xff]
    %v93 = vld [vmem:[#allocation4 + $0x8] sm:$0xff]
    %v94 = vld [vmem:[#allocation4 + $0x10] sm:$0xff]
    %v95 = vld [vmem:[#allocation4 + $0x18] sm:$0xf]
    %v96 = vld [vmem:[#allocation7] sm:$0xff]
    %v97 = vld [vmem:[#allocation7 + $0x8] sm:$0xff]
    %v98 = vld [vmem:[#allocation7 + $0x10] sm:$0xff]
    %v99 = vld [vmem:[#allocation7 + $0x18] sm:$0xff]
    %v100 = vld [vmem:[#allocation7 + $0x20] sm:$0xff]
    %v101 = vld [vmem:[#allocation7 + $0x28] sm:$0xff]
    %v102 = vld [vmem:[#allocation7 + $0x30] sm:$0xff]
    %v103 = vld [vmem:[#allocation7 + $0x38] sm:$0xff]
    %v104 = vld [vmem:[#allocation7 + $0x40] sm:$0xff]
    %v105 = vld [vmem:[#allocation7 + $0x48] sm:$0xff]
    %v106 = vld [vmem:[#allocation7 + $0x50] sm:$0xff]
    %v107 = vld [vmem:[#allocation7 + $0x58] sm:$0xff]
    %v108 = vld [vmem:[#allocation7 + $0x60] sm:$0xff]
    %v109 = vld [vmem:[#allocation7 + $0x68] sm:$0xff]
    %v110 = vld [vmem:[#allocation7 + $0x70] sm:$0xff]
    %v111 = vld [vmem:[#allocation7 + $0x78] sm:$0xff]
    %v112 = vld [vmem:[#allocation7 + $0x80] sm:$0xff]
    %v113 = vld [vmem:[#allocation7 + $0x88] sm:$0xff]
    %v114 = vld [vmem:[#allocation7 + $0x90] sm:$0xff]
    %v115 = vld [vmem:[#allocation7 + $0x98] sm:$0xff]
    %v116 = vld [vmem:[#allocation7 + $0xa0] sm:$0xff]
    %v117 = vld [vmem:[#allocation7 + $0xa8] sm:$0xff]
    %v118 = vld [vmem:[#allocation7 + $0xb0] sm:$0xff]
    %v119 = vld [vmem:[#allocation7 + $0xb8] sm:$0xff]
    %v120 = vld [vmem:[#allocation7 + $0xc0] sm:$0xff]
    %v121 = vld [vmem:[#allocation7 + $0xc8] sm:$0xff]
    %v122 = vld [vmem:[#allocation7 + $0xd0] sm:$0xff]
    %v123 = vld [vmem:[#allocation7 + $0xd8] sm:$0xff]
    %v124 = vld [vmem:[#allocation7 + $0xe0] sm:$0xff]
    %v125 = vld [vmem:[#allocation7 + $0xe8] sm:$0xff]
    %v126 = vld [vmem:[#allocation7 + $0xf0] sm:$0xff]
    %v127 = vld [vmem:[#allocation7 + $0xf8] sm:$0xff]
    %v128 = vld [vmem:[#allocation7 + $0x100] sm:$0xff]
    %v129 = vld [vmem:[#allocation7 + $0x108] sm:$0xff]
    %v130 = vld [vmem:[#allocation7 + $0x110] sm:$0xff]
    %v131 = vld [vmem:[#allocation7 + $0x118] sm:$0xff]
    %v132 = vld [vmem:[#allocation7 + $0x120] sm:$0xff]
    %v133 = vld [vmem:[#allocation7 + $0x128] sm:$0xff]
    %v134 = vld [vmem:[#allocation7 + $0x130] sm:$0xff]
    %v135 = vld [vmem:[#allocation7 + $0x138] sm:$0xff]
    %v136 = vld [vmem:[#allocation7 + $0x140] sm:$0xff]
    %v137 = vld [vmem:[#allocation7 + $0x148] sm:$0xff]
    %v138 = vld [vmem:[#allocation7 + $0x150] sm:$0xff]
    %v139 = vld [vmem:[#allocation7 + $0x158] sm:$0xff]
    %v140 = vld [vmem:[#allocation7 + $0x160] sm:$0xff]
    %v141 = vld [vmem:[#allocation7 + $0x168] sm:$0xff]
    %v142 = vld [vmem:[#allocation7 + $0x170] sm:$0xff]
    %v143 = vld [vmem:[#allocation7 + $0x178] sm:$0xff]
    %v144 = vld [vmem:[#allocation7 + $0x180] sm:$0xff]
    %v145 = vld [vmem:[#allocation7 + $0x188] sm:$0xff]
    %v146 = vld [vmem:[#allocation7 + $0x190] sm:$0xff]
    %v147 = vld [vmem:[#allocation7 + $0x198] sm:$0xff]
    %v148 = vld [vmem:[#allocation7 + $0x1a0] sm:$0xff]
    %v149 = vld [vmem:[#allocation7 + $0x1a8] sm:$0xff]
    %v150 = vld [vmem:[#allocation7 + $0x1b0] sm:$0xff]
    %v151 = vld [vmem:[#allocation7 + $0x1b8] sm:$0xff]
    %v152 = vld [vmem:[#allocation7 + $0x1c0] sm:$0xff]
    %v153 = vld [vmem:[#allocation7 + $0x1c8] sm:$0xff]
    %v154 = vld [vmem:[#allocation7 + $0x1d0] sm:$0xff]
    %v155 = vld [vmem:[#allocation7 + $0x1d8] sm:$0xff]
    %v156 = vld [vmem:[#allocation7 + $0x1e0] sm:$0xff]
    %v157 = vld [vmem:[#allocation7 + $0x1e8] sm:$0xff]
    %v158 = vld [vmem:[#allocation7 + $0x1f0] sm:$0xff]
    %v159 = vld [vmem:[#allocation7 + $0x1f8] sm:$0xff]
    %v160 = vld [vmem:[#allocation7 + $0x200] sm:$0xff]
    %v161 = vld [vmem:[#allocation7 + $0x208] sm:$0xff]
    %v162 = vld [vmem:[#allocation7 + $0x210] sm:$0xff]
    %v163 = vld [vmem:[#allocation7 + $0x218] sm:$0xff]
    %v164 = vld [vmem:[#allocation7 + $0x220] sm:$0xff]
    %v165 = vld [vmem:[#allocation7 + $0x228] sm:$0xff]
    %v166 = vld [vmem:[#allocation7 + $0x230] sm:$0xff]
    %v167 = vld [vmem:[#allocation7 + $0x238] sm:$0xff]
    %v168 = vld [vmem:[#allocation7 + $0x240] sm:$0xff]
    %v169 = vld [vmem:[#allocation7 + $0x248] sm:$0xff]
    %v170 = vld [vmem:[#allocation7 + $0x250] sm:$0xff]
    %v171 = vld [vmem:[#allocation7 + $0x258] sm:$0xff]
    %v172 = vld [vmem:[#allocation7 + $0x260] sm:$0xff]
    %v173 = vld [vmem:[#allocation7 + $0x268] sm:$0xff]
    %v174 = vld [vmem:[#allocation7 + $0x270] sm:$0xff]
    %v175 = vld [vmem:[#allocation7 + $0x278] sm:$0xff]
    %v176 = vld [vmem:[#allocation7 + $0x280] sm:$0xff]
    %v177 = vld [vmem:[#allocation7 + $0x288] sm:$0xff]
    %v178 = vld [vmem:[#allocation7 + $0x290] sm:$0xff]
    %v179 = vld [vmem:[#allocation7 + $0x298] sm:$0xff]
    %v180 = vld [vmem:[#allocation7 + $0x2a0] sm:$0xff]
    %v181 = vld [vmem:[#allocation7 + $0x2a8] sm:$0xff]
    %v182 = vld [vmem:[#allocation7 + $0x2b0] sm:$0xff]
    %v183 = vld [vmem:[#allocation7 + $0x2b8] sm:$0xff]
    %v184 = vld [vmem:[#allocation7 + $0x2c0] sm:$0xff]
    %v185 = vld [vmem:[#allocation7 + $0x2c8] sm:$0xff]
    %v186 = vld [vmem:[#allocation7 + $0x2d0] sm:$0xff]
    %v187 = vld [vmem:[#allocation7 + $0x2d8] sm:$0xff]
    %v188 = vld [vmem:[#allocation7 + $0x2e0] sm:$0xff]
    %v189 = vld [vmem:[#allocation7 + $0x2e8] sm:$0xff]
    %v190 = vld [vmem:[#allocation7 + $0x2f0] sm:$0xff]
    %v191 = vld [vmem:[#allocation7 + $0x2f8] sm:$0xff]
    %v192 = vld [vmem:[#allocation7 + $0x300] sm:$0xff]
    %v193 = vld [vmem:[#allocation7 + $0x308] sm:$0xff]
    %v194 = vld [vmem:[#allocation7 + $0x310] sm:$0xff]
    %v195 = vld [vmem:[#allocation7 + $0x318] sm:$0xff]
    %v196 = vld [vmem:[#allocation7 + $0x320] sm:$0xff]
    %v197 = vld [vmem:[#allocation7 + $0x328] sm:$0xff]
    %v198 = vld [vmem:[#allocation7 + $0x330] sm:$0xff]
    %v199 = vld [vmem:[#allocation7 + $0x338] sm:$0xff]
    %v200 = vld [vmem:[#allocation7 + $0x340] sm:$0xff]
    %v201 = vld [vmem:[#allocation7 + $0x348] sm:$0xff]
    %v202 = vld [vmem:[#allocation7 + $0x350] sm:$0xff]
    %v203 = vld [vmem:[#allocation7 + $0x358] sm:$0xff]
    %v204 = vld [vmem:[#allocation7 + $0x360] sm:$0xff]
    %v205 = vld [vmem:[#allocation7 + $0x368] sm:$0xff]
    %v206 = vld [vmem:[#allocation7 + $0x370] sm:$0xff]
    %v207 = vld [vmem:[#allocation7 + $0x378] sm:$0xff]
    %v208 = vld [vmem:[%s3] sm:$0x3]
    %v210 = vperm.slane %v208, 0
    %v211 = vperm.slane %v208, 1
    %v218 = vunpack.c.l.b16 %v92
    %v219 = vunpack.c.h.b16 %v92
    %v220 = vunpack.c.l.b16 %v93
    %v221 = vunpack.c.h.b16 %v93
    %v222 = vunpack.c.l.b16 %v94
    %v223 = vunpack.c.h.b16 %v94
    %v224 = vunpack.c.l.b16 %v95
    %v225 = vpack.c.b16 %v218, %v218
    %v226 = vpack.c.b16 %v219, %v219
    %v227 = vpack.c.b16 %v220, %v220
    %v228 = vpack.c.b16 %v221, %v221
    %v229 = vpack.c.b16 %v222, %v222
    %v230 = vpack.c.b16 %v223, %v223
    %v231 = vpack.c.b16 %v224, %v224
    %v351 = vunpack.c.l.b16 %v96
    %v352 = vunpack.c.h.b16 %v96
    %v353 = vunpack.c.l.b16 %v97
    %v354 = vunpack.c.h.b16 %v97
    %v355 = vunpack.c.l.b16 %v98
    %v356 = vunpack.c.h.b16 %v98
    %v357 = vunpack.c.l.b16 %v99
    %v358 = vunpack.c.h.b16 %v99
    %v359 = vunpack.c.l.b16 %v100
    %v360 = vunpack.c.h.b16 %v100
    %v361 = vunpack.c.l.b16 %v101
    %v362 = vunpack.c.h.b16 %v101
    %v363 = vunpack.c.l.b16 %v102
    %v364 = vunpack.c.h.b16 %v102
    %v365 = vunpack.c.l.b16 %v103
    %v366 = vunpack.c.h.b16 %v103
    %v367 = vunpack.c.l.b16 %v104
    %v368 = vunpack.c.h.b16 %v104
    %v369 = vunpack.c.l.b16 %v105
    %v370 = vunpack.c.h.b16 %v105
    %v371 = vunpack.c.l.b16 %v106
    %v372 = vunpack.c.h.b16 %v106
    %v373 = vunpack.c.l.b16 %v107
    %v374 = vunpack.c.h.b16 %v107
    %v375 = vunpack.c.l.b16 %v108
    %v376 = vunpack.c.h.b16 %v108
    %v377 = vunpack.c.l.b16 %v109
    %v378 = vunpack.c.h.b16 %v109
    %v379 = vunpack.c.l.b16 %v110
    %v380 = vunpack.c.h.b16 %v110
    %v381 = vunpack.c.l.b16 %v111
    %v382 = vunpack.c.h.b16 %v111
    %v383 = vunpack.c.l.b16 %v112
    %v384 = vunpack.c.h.b16 %v112
    %v385 = vunpack.c.l.b16 %v113
    %v386 = vunpack.c.h.b16 %v113
    %v387 = vunpack.c.l.b16 %v114
    %v388 = vunpack.c.h.b16 %v114
    %v389 = vunpack.c.l.b16 %v115
    %v390 = vunpack.c.h.b16 %v115
    %v391 = vunpack.c.l.b16 %v116
    %v392 = vunpack.c.h.b16 %v116
    %v393 = vunpack.c.l.b16 %v117
    %v394 = vunpack.c.h.b16 %v117
    %v395 = vunpack.c.l.b16 %v118
    %v396 = vunpack.c.h.b16 %v118
    %v397 = vunpack.c.l.b16 %v119
    %v398 = vunpack.c.h.b16 %v119
    %v399 = vunpack.c.l.b16 %v120
    %v400 = vunpack.c.h.b16 %v120
    %v401 = vunpack.c.l.b16 %v121
    %v402 = vunpack.c.h.b16 %v121
    %v403 = vunpack.c.l.b16 %v122
    %v404 = vunpack.c.h.b16 %v122
    %v405 = vunpack.c.l.b16 %v123
    %v406 = vunpack.c.h.b16 %v123
    %v407 = vunpack.c.l.b16 %v124
    %v408 = vunpack.c.h.b16 %v124
    %v409 = vunpack.c.l.b16 %v125
    %v410 = vunpack.c.h.b16 %v125
    %v411 = vunpack.c.l.b16 %v126
    %v412 = vunpack.c.h.b16 %v126
    %v413 = vunpack.c.l.b16 %v127
    %v414 = vunpack.c.h.b16 %v127
    %v415 = vunpack.c.l.b16 %v128
    %v416 = vunpack.c.h.b16 %v128
    %v417 = vunpack.c.l.b16 %v129
    %v418 = vunpack.c.h.b16 %v129
    %v419 = vunpack.c.l.b16 %v130
    %v420 = vunpack.c.h.b16 %v130
    %v421 = vunpack.c.l.b16 %v131
    %v422 = vunpack.c.h.b16 %v131
    %v423 = vunpack.c.l.b16 %v132
    %v424 = vunpack.c.h.b16 %v132
    %v425 = vunpack.c.l.b16 %v133
    %v426 = vunpack.c.h.b16 %v133
    %v427 = vunpack.c.l.b16 %v134
    %v428 = vunpack.c.h.b16 %v134
    %v429 = vunpack.c.l.b16 %v135
    %v430 = vunpack.c.h.b16 %v135
    %v431 = vunpack.c.l.b16 %v136
    %v432 = vunpack.c.h.b16 %v136
    %v433 = vunpack.c.l.b16 %v137
    %v434 = vunpack.c.h.b16 %v137
    %v435 = vunpack.c.l.b16 %v138
    %v436 = vunpack.c.h.b16 %v138
    %v437 = vunpack.c.l.b16 %v139
    %v438 = vunpack.c.h.b16 %v139
    %v439 = vunpack.c.l.b16 %v140
    %v440 = vunpack.c.h.b16 %v140
    %v441 = vunpack.c.l.b16 %v141
    %v442 = vunpack.c.h.b16 %v141
    %v443 = vunpack.c.l.b16 %v142
    %v444 = vunpack.c.h.b16 %v142
    %v445 = vunpack.c.l.b16 %v143
    %v446 = vunpack.c.h.b16 %v143
    %v447 = vunpack.c.l.b16 %v144
    %v448 = vunpack.c.h.b16 %v144
    %v449 = vunpack.c.l.b16 %v145
    %v450 = vunpack.c.h.b16 %v145
    %v451 = vunpack.c.l.b16 %v146
    %v452 = vunpack.c.h.b16 %v146
    %v453 = vunpack.c.l.b16 %v147
    %v454 = vunpack.c.h.b16 %v147
    %v455 = vunpack.c.l.b16 %v148
    %v456 = vunpack.c.h.b16 %v148
    %v457 = vunpack.c.l.b16 %v149
    %v458 = vunpack.c.h.b16 %v149
    %v459 = vunpack.c.l.b16 %v150
    %v460 = vunpack.c.h.b16 %v150
    %v461 = vunpack.c.l.b16 %v151
    %v462 = vunpack.c.h.b16 %v151
    %v463 = vunpack.c.l.b16 %v152
    %v464 = vunpack.c.h.b16 %v152
    %v465 = vunpack.c.l.b16 %v153
    %v466 = vunpack.c.h.b16 %v153
    %v467 = vunpack.c.l.b16 %v154
    %v468 = vunpack.c.h.b16 %v154
    %v469 = vunpack.c.l.b16 %v155
    %v470 = vunpack.c.h.b16 %v155
    %v471 = vunpack.c.l.b16 %v156
    %v472 = vunpack.c.h.b16 %v156
    %v473 = vunpack.c.l.b16 %v157
    %v474 = vunpack.c.h.b16 %v157
    %v475 = vunpack.c.l.b16 %v158
    %v476 = vunpack.c.h.b16 %v158
    %v477 = vunpack.c.l.b16 %v159
    %v478 = vunpack.c.h.b16 %v159
    %v479 = vunpack.c.l.b16 %v160
    %v480 = vunpack.c.h.b16 %v160
    %v481 = vunpack.c.l.b16 %v161
    %v482 = vunpack.c.h.b16 %v161
    %v483 = vunpack.c.l.b16 %v162
    %v484 = vunpack.c.h.b16 %v162
    %v485 = vunpack.c.l.b16 %v163
    %v486 = vunpack.c.h.b16 %v163
    %v487 = vunpack.c.l.b16 %v164
    %v488 = vunpack.c.h.b16 %v164
    %v489 = vunpack.c.l.b16 %v165
    %v490 = vunpack.c.h.b16 %v165
    %v491 = vunpack.c.l.b16 %v166
    %v492 = vunpack.c.h.b16 %v166
    %v493 = vunpack.c.l.b16 %v167
    %v494 = vunpack.c.h.b16 %v167
    %v495 = vunpack.c.l.b16 %v168
    %v496 = vunpack.c.h.b16 %v168
    %v497 = vunpack.c.l.b16 %v169
    %v498 = vunpack.c.h.b16 %v169
    %v499 = vunpack.c.l.b16 %v170
    %v500 = vunpack.c.h.b16 %v170
    %v501 = vunpack.c.l.b16 %v171
    %v502 = vunpack.c.h.b16 %v171
    %v503 = vunpack.c.l.b16 %v172
    %v504 = vunpack.c.h.b16 %v172
    %v505 = vunpack.c.l.b16 %v173
    %v506 = vunpack.c.h.b16 %v173
    %v507 = vunpack.c.l.b16 %v174
    %v508 = vunpack.c.h.b16 %v174
    %v509 = vunpack.c.l.b16 %v175
    %v510 = vunpack.c.h.b16 %v175
    %v511 = vunpack.c.l.b16 %v176
    %v512 = vunpack.c.h.b16 %v176
    %v513 = vunpack.c.l.b16 %v177
    %v514 = vunpack.c.h.b16 %v177
    %v515 = vunpack.c.l.b16 %v178
    %v516 = vunpack.c.h.b16 %v178
    %v517 = vunpack.c.l.b16 %v179
    %v518 = vunpack.c.h.b16 %v179
    %v519 = vunpack.c.l.b16 %v180
    %v520 = vunpack.c.h.b16 %v180
    %v521 = vunpack.c.l.b16 %v181
    %v522 = vunpack.c.h.b16 %v181
    %v523 = vunpack.c.l.b16 %v182
    %v524 = vunpack.c.h.b16 %v182
    %v525 = vunpack.c.l.b16 %v183
    %v526 = vunpack.c.h.b16 %v183
    %v527 = vunpack.c.l.b16 %v184
    %v528 = vunpack.c.h.b16 %v184
    %v529 = vunpack.c.l.b16 %v185
    %v530 = vunpack.c.h.b16 %v185
    %v531 = vunpack.c.l.b16 %v186
    %v532 = vunpack.c.h.b16 %v186
    %v533 = vunpack.c.l.b16 %v187
    %v534 = vunpack.c.h.b16 %v187
    %v535 = vunpack.c.l.b16 %v188
    %v536 = vunpack.c.h.b16 %v188
    %v537 = vunpack.c.l.b16 %v189
    %v538 = vunpack.c.h.b16 %v189
    %v539 = vunpack.c.l.b16 %v190
    %v540 = vunpack.c.h.b16 %v190
    %v541 = vunpack.c.l.b16 %v191
    %v542 = vunpack.c.h.b16 %v191
    %v543 = vunpack.c.l.b16 %v192
    %v544 = vunpack.c.h.b16 %v192
    %v545 = vunpack.c.l.b16 %v193
    %v546 = vunpack.c.h.b16 %v193
    %v547 = vunpack.c.l.b16 %v194
    %v548 = vunpack.c.h.b16 %v194
    %v549 = vunpack.c.l.b16 %v195
    %v550 = vunpack.c.h.b16 %v195
    %v551 = vunpack.c.l.b16 %v196
    %v552 = vunpack.c.h.b16 %v196
    %v553 = vunpack.c.l.b16 %v197
    %v554 = vunpack.c.h.b16 %v197
    %v555 = vunpack.c.l.b16 %v198
    %v556 = vunpack.c.h.b16 %v198
    %v557 = vunpack.c.l.b16 %v199
    %v558 = vunpack.c.h.b16 %v199
    %v559 = vunpack.c.l.b16 %v200
    %v560 = vunpack.c.h.b16 %v200
    %v561 = vunpack.c.l.b16 %v201
    %v562 = vunpack.c.h.b16 %v201
    %v563 = vunpack.c.l.b16 %v202
    %v564 = vunpack.c.h.b16 %v202
    %v565 = vunpack.c.l.b16 %v203
    %v566 = vunpack.c.h.b16 %v203
    %v567 = vunpack.c.l.b16 %v204
    %v568 = vunpack.c.h.b16 %v204
    %v569 = vunpack.c.l.b16 %v205
    %v570 = vunpack.c.h.b16 %v205
    %v571 = vunpack.c.l.b16 %v206
    %v572 = vunpack.c.h.b16 %v206
    %v573 = vunpack.c.l.b16 %v207
    %v574 = vunpack.c.h.b16 %v207
    %v575 = vpack.c.b16 %v353, %v351
    %v576 = vpack.c.b16 %v354, %v352
    %v577 = vpack.c.b16 %v357, %v355
    %v578 = vpack.c.b16 %v358, %v356
    %v579 = vpack.c.b16 %v361, %v359
    %v580 = vpack.c.b16 %v362, %v360
    %v581 = vpack.c.b16 %v365, %v363
    %v582 = vpack.c.b16 %v366, %v364
    %v583 = vpack.c.b16 %v369, %v367
    %v584 = vpack.c.b16 %v370, %v368
    %v585 = vpack.c.b16 %v373, %v371
    %v586 = vpack.c.b16 %v374, %v372
    %v587 = vpack.c.b16 %v377, %v375
    %v588 = vpack.c.b16 %v378, %v376
    %v589 = vpack.c.b16 %v381, %v379
    %v590 = vpack.c.b16 %v382, %v380
    %v591 = vpack.c.b16 %v385, %v383
    %v592 = vpack.c.b16 %v386, %v384
    %v593 = vpack.c.b16 %v389, %v387
    %v594 = vpack.c.b16 %v390, %v388
    %v595 = vpack.c.b16 %v393, %v391
    %v596 = vpack.c.b16 %v394, %v392
    %v597 = vpack.c.b16 %v397, %v395
    %v598 = vpack.c.b16 %v398, %v396
    %v599 = vpack.c.b16 %v401, %v399
    %v600 = vpack.c.b16 %v402, %v400
    %v601 = vpack.c.b16 %v405, %v403
    %v602 = vpack.c.b16 %v406, %v404
    %v603 = vpack.c.b16 %v409, %v407
    %v604 = vpack.c.b16 %v410, %v408
    %v605 = vpack.c.b16 %v413, %v411
    %v606 = vpack.c.b16 %v414, %v412
    %v607 = vpack.c.b16 %v417, %v415
    %v608 = vpack.c.b16 %v418, %v416
    %v609 = vpack.c.b16 %v421, %v419
    %v610 = vpack.c.b16 %v422, %v420
    %v611 = vpack.c.b16 %v425, %v423
    %v612 = vpack.c.b16 %v426, %v424
    %v613 = vpack.c.b16 %v429, %v427
    %v614 = vpack.c.b16 %v430, %v428
    %v615 = vpack.c.b16 %v433, %v431
    %v616 = vpack.c.b16 %v434, %v432
    %v617 = vpack.c.b16 %v437, %v435
    %v618 = vpack.c.b16 %v438, %v436
    %v619 = vpack.c.b16 %v441, %v439
    %v620 = vpack.c.b16 %v442, %v440
    %v621 = vpack.c.b16 %v445, %v443
    %v622 = vpack.c.b16 %v446, %v444
    %v623 = vpack.c.b16 %v449, %v447
    %v624 = vpack.c.b16 %v450, %v448
    %v625 = vpack.c.b16 %v453, %v451
    %v626 = vpack.c.b16 %v454, %v452
    %v627 = vpack.c.b16 %v457, %v455
    %v628 = vpack.c.b16 %v458, %v456
    %v629 = vpack.c.b16 %v461, %v459
    %v630 = vpack.c.b16 %v462, %v460
    %v631 = vpack.c.b16 %v465, %v463
    %v632 = vpack.c.b16 %v466, %v464
    %v633 = vpack.c.b16 %v469, %v467
    %v634 = vpack.c.b16 %v470, %v468
    %v635 = vpack.c.b16 %v473, %v471
    %v636 = vpack.c.b16 %v474, %v472
    %v637 = vpack.c.b16 %v477, %v475
    %v638 = vpack.c.b16 %v478, %v476
    %v639 = vpack.c.b16 %v481, %v479
    %v640 = vpack.c.b16 %v482, %v480
    %v641 = vpack.c.b16 %v485, %v483
    %v642 = vpack.c.b16 %v486, %v484
    %v643 = vpack.c.b16 %v489, %v487
    %v644 = vpack.c.b16 %v490, %v488
    %v645 = vpack.c.b16 %v493, %v491
    %v646 = vpack.c.b16 %v494, %v492
    %v647 = vpack.c.b16 %v497, %v495
    %v648 = vpack.c.b16 %v498, %v496
    %v649 = vpack.c.b16 %v501, %v499
    %v650 = vpack.c.b16 %v502, %v500
    %v651 = vpack.c.b16 %v505, %v503
    %v652 = vpack.c.b16 %v506, %v504
    %v653 = vpack.c.b16 %v509, %v507
    %v654 = vpack.c.b16 %v510, %v508
    %v655 = vpack.c.b16 %v513, %v511
    %v656 = vpack.c.b16 %v514, %v512
    %v657 = vpack.c.b16 %v517, %v515
    %v658 = vpack.c.b16 %v518, %v516
    %v659 = vpack.c.b16 %v521, %v519
    %v660 = vpack.c.b16 %v522, %v520
    %v661 = vpack.c.b16 %v525, %v523
    %v662 = vpack.c.b16 %v526, %v524
    %v663 = vpack.c.b16 %v529, %v527
    %v664 = vpack.c.b16 %v530, %v528
    %v665 = vpack.c.b16 %v533, %v531
    %v666 = vpack.c.b16 %v534, %v532
    %v667 = vpack.c.b16 %v537, %v535
    %v668 = vpack.c.b16 %v538, %v536
    %v669 = vpack.c.b16 %v541, %v539
    %v670 = vpack.c.b16 %v542, %v540
    %v671 = vpack.c.b16 %v545, %v543
    %v672 = vpack.c.b16 %v546, %v544
    %v673 = vpack.c.b16 %v549, %v547
    %v674 = vpack.c.b16 %v550, %v548
    %v675 = vpack.c.b16 %v553, %v551
    %v676 = vpack.c.b16 %v554, %v552
    %v677 = vpack.c.b16 %v557, %v555
    %v678 = vpack.c.b16 %v558, %v556
    %v679 = vpack.c.b16 %v561, %v559
    %v680 = vpack.c.b16 %v562, %v560
    %v681 = vpack.c.b16 %v565, %v563
    %v682 = vpack.c.b16 %v566, %v564
    %v683 = vpack.c.b16 %v569, %v567
    %v684 = vpack.c.b16 %v570, %v568
    %v685 = vpack.c.b16 %v573, %v571
    %v686 = vpack.c.b16 %v574, %v572
    %799 = vmatpush.bf16.msra.mxu0 %v589
    %800 = vmatpush.bf16.msra.mxu0 %v587
    %801 = vmatpush.bf16.msra.mxu0 %v585
    %802 = vmatpush.bf16.msra.mxu0 %v583
    %803 = vmatpush.bf16.msra.mxu0 %v581
    %804 = vmatpush.bf16.msra.mxu0 %v579
    %805 = vmatpush.bf16.msra.mxu0 %v577
    %806 = vmatpush.bf16.msra.mxu0 %v575
    %807 = vmatmul.bf16.gmra.mxu0 %v225
    %v808 = vpop.f32.mrf.mxu0
    %v809 = vadd.f32 %v210, %v808
    %v810 = vpop.f32.mrf.mxu0
    %811 = vdwg.mxu0
    %812 = vmatpush.bf16.msra.mxu0 %v605
    %813 = vmatpush.bf16.msra.mxu0 %v603
    %814 = vmatpush.bf16.msra.mxu0 %v601
    %815 = vmatpush.bf16.msra.mxu0 %v599
    %816 = vmatpush.bf16.msra.mxu0 %v597
    %817 = vmatpush.bf16.msra.mxu0 %v595
    %818 = vmatpush.bf16.msra.mxu0 %v593
    %819 = vmatpush.bf16.msra.mxu0 %v591
    %820 = vmatmul.bf16.gmra.mxu0 %v226
    %v821 = vpop.f32.mrf.mxu0
    %v822 = vadd.f32 %v809, %v821
    %v823 = vpop.f32.mrf.mxu0
    %824 = vdwg.mxu0
    %825 = vmatpush.bf16.msra.mxu0 %v621
    %826 = vmatpush.bf16.msra.mxu0 %v619
    %827 = vmatpush.bf16.msra.mxu0 %v617
    %828 = vmatpush.bf16.msra.mxu0 %v615
    %829 = vmatpush.bf16.msra.mxu0 %v613
    %830 = vmatpush.bf16.msra.mxu0 %v611
    %831 = vmatpush.bf16.msra.mxu0 %v609
    %832 = vmatpush.bf16.msra.mxu0 %v607
    %833 = vmatmul.bf16.gmra.mxu0 %v227
    %v834 = vpop.f32.mrf.mxu0
    %v835 = vadd.f32 %v822, %v834
    %v836 = vpop.f32.mrf.mxu0
    %837 = vdwg.mxu0
    %838 = vmatpush.bf16.msra.mxu0 %v637
    %839 = vmatpush.bf16.msra.mxu0 %v635
    %840 = vmatpush.bf16.msra.mxu0 %v633
    %841 = vmatpush.bf16.msra.mxu0 %v631
    %842 = vmatpush.bf16.msra.mxu0 %v629
    %843 = vmatpush.bf16.msra.mxu0 %v627
    %844 = vmatpush.bf16.msra.mxu0 %v625
    %845 = vmatpush.bf16.msra.mxu0 %v623
    %846 = vmatmul.bf16.gmra.mxu0 %v228
    %v847 = vpop.f32.mrf.mxu0
    %v848 = vadd.f32 %v835, %v847
    %v849 = vpop.f32.mrf.mxu0
    %850 = vdwg.mxu0
    %851 = vmatpush.bf16.msra.mxu0 %v653
    %852 = vmatpush.bf16.msra.mxu0 %v651
    %853 = vmatpush.bf16.msra.mxu0 %v649
    %854 = vmatpush.bf16.msra.mxu0 %v647
    %855 = vmatpush.bf16.msra.mxu0 %v645
    %856 = vmatpush.bf16.msra.mxu0 %v643
    %857 = vmatpush.bf16.msra.mxu0 %v641
    %858 = vmatpush.bf16.msra.mxu0 %v639
    %859 = vmatmul.bf16.gmra.mxu0 %v229
    %v860 = vpop.f32.mrf.mxu0
    %v861 = vadd.f32 %v848, %v860
    %v862 = vpop.f32.mrf.mxu0
    %863 = vdwg.mxu0
    %864 = vmatpush.bf16.msra.mxu0 %v669
    %865 = vmatpush.bf16.msra.mxu0 %v667
    %866 = vmatpush.bf16.msra.mxu0 %v665
    %867 = vmatpush.bf16.msra.mxu0 %v663
    %868 = vmatpush.bf16.msra.mxu0 %v661
    %869 = vmatpush.bf16.msra.mxu0 %v659
    %870 = vmatpush.bf16.msra.mxu0 %v657
    %871 = vmatpush.bf16.msra.mxu0 %v655
    %872 = vmatmul.bf16.gmra.mxu0 %v230
    %v873 = vpop.f32.mrf.mxu0
    %v874 = vadd.f32 %v861, %v873
    %v875 = vpop.f32.mrf.mxu0
    %876 = vdwg.mxu0
    %877 = vmatpush.bf16.msra.mxu0 %v685
    %878 = vmatpush.bf16.msra.mxu0 %v683
    %879 = vmatpush.bf16.msra.mxu0 %v681
    %880 = vmatpush.bf16.msra.mxu0 %v679
    %881 = vmatpush.bf16.msra.mxu0 %v677
    %882 = vmatpush.bf16.msra.mxu0 %v675
    %883 = vmatpush.bf16.msra.mxu0 %v673
    %884 = vmatpush.bf16.msra.mxu0 %v671
    %885 = vmatmul.bf16.gmra.mxu0 %v231
    %v886 = vpop.f32.mrf.mxu0
    %v887 = vadd.f32 %v874, %v886
    %v888 = vpop.f32.mrf.mxu0
    %889 = vdwg.mxu0
    %890 = vmatpush.bf16.msra.mxu0 %v590
    %891 = vmatpush.bf16.msra.mxu0 %v588
    %892 = vmatpush.bf16.msra.mxu0 %v586
    %893 = vmatpush.bf16.msra.mxu0 %v584
    %894 = vmatpush.bf16.msra.mxu0 %v582
    %895 = vmatpush.bf16.msra.mxu0 %v580
    %896 = vmatpush.bf16.msra.mxu0 %v578
    %897 = vmatpush.bf16.msra.mxu0 %v576
    %898 = vmatmul.bf16.gmra.mxu0 %v225
    %v899 = vpop.f32.mrf.mxu0
    %v900 = vadd.f32 %v211, %v899
    %v901 = vpop.f32.mrf.mxu0
    %902 = vdwg.mxu0
    %903 = vmatpush.bf16.msra.mxu0 %v606
    %904 = vmatpush.bf16.msra.mxu0 %v604
    %905 = vmatpush.bf16.msra.mxu0 %v602
    %906 = vmatpush.bf16.msra.mxu0 %v600
    %907 = vmatpush.bf16.msra.mxu0 %v598
    %908 = vmatpush.bf16.msra.mxu0 %v596
    %909 = vmatpush.bf16.msra.mxu0 %v594
    %910 = vmatpush.bf16.msra.mxu0 %v592
    %911 = vmatmul.bf16.gmra.mxu0 %v226
    %v912 = vpop.f32.mrf.mxu0
    %v913 = vadd.f32 %v900, %v912
    %v914 = vpop.f32.mrf.mxu0
    %915 = vdwg.mxu0
    %916 = vmatpush.bf16.msra.mxu0 %v622
    %917 = vmatpush.bf16.msra.mxu0 %v620
    %918 = vmatpush.bf16.msra.mxu0 %v618
    %919 = vmatpush.bf16.msra.mxu0 %v616
    %920 = vmatpush.bf16.msra.mxu0 %v614
    %921 = vmatpush.bf16.msra.mxu0 %v612
    %922 = vmatpush.bf16.msra.mxu0 %v610
    %923 = vmatpush.bf16.msra.mxu0 %v608
    %924 = vmatmul.bf16.gmra.mxu0 %v227
    %v925 = vpop.f32.mrf.mxu0
    %v926 = vadd.f32 %v913, %v925
    %v927 = vpop.f32.mrf.mxu0
    %928 = vdwg.mxu0
    %929 = vmatpush.bf16.msra.mxu0 %v638
    %930 = vmatpush.bf16.msra.mxu0 %v636
    %931 = vmatpush.bf16.msra.mxu0 %v634
    %932 = vmatpush.bf16.msra.mxu0 %v632
    %933 = vmatpush.bf16.msra.mxu0 %v630
    %934 = vmatpush.bf16.msra.mxu0 %v628
    %935 = vmatpush.bf16.msra.mxu0 %v626
    %936 = vmatpush.bf16.msra.mxu0 %v624
    %937 = vmatmul.bf16.gmra.mxu0 %v228
    %v938 = vpop.f32.mrf.mxu0
    %v939 = vadd.f32 %v926, %v938
    %v940 = vpop.f32.mrf.mxu0
    %941 = vdwg.mxu0
    %942 = vmatpush.bf16.msra.mxu0 %v654
    %943 = vmatpush.bf16.msra.mxu0 %v652
    %944 = vmatpush.bf16.msra.mxu0 %v650
    %945 = vmatpush.bf16.msra.mxu0 %v648
    %946 = vmatpush.bf16.msra.mxu0 %v646
    %947 = vmatpush.bf16.msra.mxu0 %v644
    %948 = vmatpush.bf16.msra.mxu0 %v642
    %949 = vmatpush.bf16.msra.mxu0 %v640
    %950 = vmatmul.bf16.gmra.mxu0 %v229
    %v951 = vpop.f32.mrf.mxu0
    %v952 = vadd.f32 %v939, %v951
    %v953 = vpop.f32.mrf.mxu0
    %954 = vdwg.mxu0
    %955 = vmatpush.bf16.msra.mxu0 %v670
    %956 = vmatpush.bf16.msra.mxu0 %v668
    %957 = vmatpush.bf16.msra.mxu0 %v666
    %958 = vmatpush.bf16.msra.mxu0 %v664
    %959 = vmatpush.bf16.msra.mxu0 %v662
    %960 = vmatpush.bf16.msra.mxu0 %v660
    %961 = vmatpush.bf16.msra.mxu0 %v658
    %962 = vmatpush.bf16.msra.mxu0 %v656
    %963 = vmatmul.bf16.gmra.mxu0 %v230
    %v964 = vpop.f32.mrf.mxu0
    %v965 = vadd.f32 %v952, %v964
    %v966 = vpop.f32.mrf.mxu0
    %967 = vdwg.mxu0
    %968 = vmatpush.bf16.msra.mxu0 %v686
    %969 = vmatpush.bf16.msra.mxu0 %v684
    %970 = vmatpush.bf16.msra.mxu0 %v682
    %971 = vmatpush.bf16.msra.mxu0 %v680
    %972 = vmatpush.bf16.msra.mxu0 %v678
    %973 = vmatpush.bf16.msra.mxu0 %v676
    %974 = vmatpush.bf16.msra.mxu0 %v674
    %975 = vmatpush.bf16.msra.mxu0 %v672
    %976 = vmatmul.bf16.gmra.mxu0 %v231
    %v977 = vpop.f32.mrf.mxu0
    %v978 = vadd.f32 %v965, %v977
    %v979 = vpop.f32.mrf.mxu0
    %980 = vdwg.mxu0
    %v981 = vmax.f32 %v887, 0.0
    %v982 = vmax.f32 %v978, 0.0
    %v983 = vlaneseq
    %v984 = vshrl.u32 %v983, 7
    %v985 = vstv %s91
    %v986 = vadd.s32 %v984, %v985
    %v987 = vlaneseq
    %v988 = vand.u32 %v987, 127
    %v989 = vadd.s32 %v988, 128
    %v990 = vmul.u32 %v986, 2654435769
    %v991 = vadd.s32 %v990, %v988
    %v992 = vadd.s32 %v990, %v989
    %s993 = smul.u32 %s90, 2246822507
    %v994 = vstv %s993
    %v995 = vxor.u32 %v991, %v994
    %v996 = vxor.u32 %v992, %v994
    %v997 = vxor.u32 %v995, 3266489909
    %v998 = vxor.u32 %v996, 3266489909
    %v999 = vshrl.u32 %v997, 16
    %v1000 = vshrl.u32 %v998, 16
    %v1001 = vxor.u32 %v997, %v999
    %v1002 = vxor.u32 %v998, %v1000
    %v1003 = vmul.u32 %v1001, 2146121005
    %v1004 = vmul.u32 %v1002, 2146121005
    %v1005 = vshrl.u32 %v1003, 15
    %v1006 = vshrl.u32 %v1004, 15
    %v1007 = vxor.u32 %v1003, %v1005
    %v1008 = vxor.u32 %v1004, %v1006
    %v1009 = vmul.u32 %v1007, 2221713035
    %v1010 = vmul.u32 %v1008, 2221713035
    %v1011 = vshrl.u32 %v1009, 16
    %v1012 = vshrl.u32 %v1010, 16
    %v1013 = vxor.u32 %v1009, %v1011
    %v1014 = vxor.u32 %v1010, %v1012
    %v1015 = vadd.s32 %v1013, 2147483648
    %vm1017 = vcmp.ge.s32.totalorder %v1015, 3006477107
    %v1018 = vadd.s32 %v1014, 2147483648
    %vm1020 = vcmp.ge.s32.totalorder %v1018, 3006477107
    %v1021 = vmul.f32 %v981, 1.25
    %v1022 = vmul.f32 %v982, 1.25
    %v1023 = vsel %vm1017, %v1021, 0.0
    %v1024 = vsel %vm1020, %v1022, 0.0
    %v1025 = vpack.c.bf16 %v1023, %v1023
    %v1026 = vpack.c.bf16 %v1024, %v1024
    %v1027 = vld [vmem:[#allocation9] sm:$0xff]
    %v1028 = vld [vmem:[#allocation9 + $0x8] sm:$0xff]
    %v1029 = vld [vmem:[#allocation9 + $0x10] sm:$0xff]
    %v1030 = vld [vmem:[#allocation9 + $0x18] sm:$0xff]
    %v1031 = vld [vmem:[#allocation9 + $0x20] sm:$0xff]
    %v1032 = vld [vmem:[#allocation9 + $0x28] sm:$0xff]
    %v1033 = vld [vmem:[#allocation9 + $0x30] sm:$0xff]
    %v1034 = vld [vmem:[#allocation9 + $0x38] sm:$0xff]
    %v1035 = vld [vmem:[#allocation9 + $0x40] sm:$0xff]
    %v1036 = vld [vmem:[#allocation9 + $0x48] sm:$0xff]
    %v1037 = vld [vmem:[#allocation9 + $0x50] sm:$0xff]
    %v1038 = vld [vmem:[#allocation9 + $0x58] sm:$0xff]
    %v1039 = vld [vmem:[#allocation9 + $0x60] sm:$0xff]
    %v1040 = vld [vmem:[#allocation9 + $0x68] sm:$0xff]
    %v1041 = vld [vmem:[#allocation9 + $0x70] sm:$0xff]
    %v1042 = vld [vmem:[#allocation9 + $0x78] sm:$0xff]
    %v1043 = vld [vmem:[#allocation9 + $0x80] sm:$0xff]
    %v1044 = vld [vmem:[#allocation9 + $0x88] sm:$0xff]
    %v1045 = vld [vmem:[#allocation9 + $0x90] sm:$0xff]
    %v1046 = vld [vmem:[#allocation9 + $0x98] sm:$0xff]
    %v1047 = vld [vmem:[#allocation9 + $0xa0] sm:$0xff]
    %v1048 = vld [vmem:[#allocation9 + $0xa8] sm:$0xff]
    %v1049 = vld [vmem:[#allocation9 + $0xb0] sm:$0xff]
    %v1050 = vld [vmem:[#allocation9 + $0xb8] sm:$0xff]
    %v1051 = vld [vmem:[#allocation9 + $0xc0] sm:$0xff]
    %v1052 = vld [vmem:[#allocation9 + $0xc8] sm:$0xff]
    %v1053 = vld [vmem:[#allocation9 + $0xd0] sm:$0xff]
    %v1054 = vld [vmem:[#allocation9 + $0xd8] sm:$0xff]
    %v1055 = vld [vmem:[#allocation9 + $0xe0] sm:$0xff]
    %v1056 = vld [vmem:[#allocation9 + $0xe8] sm:$0xff]
    %v1057 = vld [vmem:[#allocation9 + $0xf0] sm:$0xff]
    %v1058 = vld [vmem:[#allocation9 + $0xf8] sm:$0xff]
    %v1059 = vld [vmem:[%s5] sm:$0x3]
    %v1061 = vperm.slane %v1059, 0
    %v1062 = vperm.slane %v1059, 1
    %v1097 = vunpack.c.l.b16 %v1027
    %v1098 = vunpack.c.h.b16 %v1027
    %v1099 = vunpack.c.l.b16 %v1028
    %v1100 = vunpack.c.h.b16 %v1028
    %v1101 = vunpack.c.l.b16 %v1029
    %v1102 = vunpack.c.h.b16 %v1029
    %v1103 = vunpack.c.l.b16 %v1030
    %v1104 = vunpack.c.h.b16 %v1030
    %v1105 = vunpack.c.l.b16 %v1031
    %v1106 = vunpack.c.h.b16 %v1031
    %v1107 = vunpack.c.l.b16 %v1032
    %v1108 = vunpack.c.h.b16 %v1032
    %v1109 = vunpack.c.l.b16 %v1033
    %v1110 = vunpack.c.h.b16 %v1033
    %v1111 = vunpack.c.l.b16 %v1034
    %v1112 = vunpack.c.h.b16 %v1034
    %v1113 = vunpack.c.l.b16 %v1035
    %v1114 = vunpack.c.h.b16 %v1035
    %v1115 = vunpack.c.l.b16 %v1036
    %v1116 = vunpack.c.h.b16 %v1036
    %v1117 = vunpack.c.l.b16 %v1037
    %v1118 = vunpack.c.h.b16 %v1037
    %v1119 = vunpack.c.l.b16 %v1038
    %v1120 = vunpack.c.h.b16 %v1038
    %v1121 = vunpack.c.l.b16 %v1039
    %v1122 = vunpack.c.h.b16 %v1039
    %v1123 = vunpack.c.l.b16 %v1040
    %v1124 = vunpack.c.h.b16 %v1040
    %v1125 = vunpack.c.l.b16 %v1041
    %v1126 = vunpack.c.h.b16 %v1041
    %v1127 = vunpack.c.l.b16 %v1042
    %v1128 = vunpack.c.h.b16 %v1042
    %v1129 = vunpack.c.l.b16 %v1043
    %v1130 = vunpack.c.h.b16 %v1043
    %v1131 = vunpack.c.l.b16 %v1044
    %v1132 = vunpack.c.h.b16 %v1044
    %v1133 = vunpack.c.l.b16 %v1045
    %v1134 = vunpack.c.h.b16 %v1045
    %v1135 = vunpack.c.l.b16 %v1046
    %v1136 = vunpack.c.h.b16 %v1046
    %v1137 = vunpack.c.l.b16 %v1047
    %v1138 = vunpack.c.h.b16 %v1047
    %v1139 = vunpack.c.l.b16 %v1048
    %v1140 = vunpack.c.h.b16 %v1048
    %v1141 = vunpack.c.l.b16 %v1049
    %v1142 = vunpack.c.h.b16 %v1049
    %v1143 = vunpack.c.l.b16 %v1050
    %v1144 = vunpack.c.h.b16 %v1050
    %v1145 = vunpack.c.l.b16 %v1051
    %v1146 = vunpack.c.h.b16 %v1051
    %v1147 = vunpack.c.l.b16 %v1052
    %v1148 = vunpack.c.h.b16 %v1052
    %v1149 = vunpack.c.l.b16 %v1053
    %v1150 = vunpack.c.h.b16 %v1053
    %v1151 = vunpack.c.l.b16 %v1054
    %v1152 = vunpack.c.h.b16 %v1054
    %v1153 = vunpack.c.l.b16 %v1055
    %v1154 = vunpack.c.h.b16 %v1055
    %v1155 = vunpack.c.l.b16 %v1056
    %v1156 = vunpack.c.h.b16 %v1056
    %v1157 = vunpack.c.l.b16 %v1057
    %v1158 = vunpack.c.h.b16 %v1057
    %v1159 = vunpack.c.l.b16 %v1058
    %v1160 = vunpack.c.h.b16 %v1058
    %v1161 = vpack.c.b16 %v1099, %v1097
    %v1162 = vpack.c.b16 %v1100, %v1098
    %v1163 = vpack.c.b16 %v1103, %v1101
    %v1164 = vpack.c.b16 %v1104, %v1102
    %v1165 = vpack.c.b16 %v1107, %v1105
    %v1166 = vpack.c.b16 %v1108, %v1106
    %v1167 = vpack.c.b16 %v1111, %v1109
    %v1168 = vpack.c.b16 %v1112, %v1110
    %v1169 = vpack.c.b16 %v1115, %v1113
    %v1170 = vpack.c.b16 %v1116, %v1114
    %v1171 = vpack.c.b16 %v1119, %v1117
    %v1172 = vpack.c.b16 %v1120, %v1118
    %v1173 = vpack.c.b16 %v1123, %v1121
    %v1174 = vpack.c.b16 %v1124, %v1122
    %v1175 = vpack.c.b16 %v1127, %v1125
    %v1176 = vpack.c.b16 %v1128, %v1126
    %v1177 = vpack.c.b16 %v1131, %v1129
    %v1178 = vpack.c.b16 %v1132, %v1130
    %v1179 = vpack.c.b16 %v1135, %v1133
    %v1180 = vpack.c.b16 %v1136, %v1134
    %v1181 = vpack.c.b16 %v1139, %v1137
    %v1182 = vpack.c.b16 %v1140, %v1138
    %v1183 = vpack.c.b16 %v1143, %v1141
    %v1184 = vpack.c.b16 %v1144, %v1142
    %v1185 = vpack.c.b16 %v1147, %v1145
    %v1186 = vpack.c.b16 %v1148, %v1146
    %v1187 = vpack.c.b16 %v1151, %v1149
    %v1188 = vpack.c.b16 %v1152, %v1150
    %v1189 = vpack.c.b16 %v1155, %v1153
    %v1190 = vpack.c.b16 %v1156, %v1154
    %v1191 = vpack.c.b16 %v1159, %v1157
    %v1192 = vpack.c.b16 %v1160, %v1158
    %1225 = vmatpush.bf16.msra.mxu0 %v1175
    %1226 = vmatpush.bf16.msra.mxu0 %v1173
    %1227 = vmatpush.bf16.msra.mxu0 %v1171
    %1228 = vmatpush.bf16.msra.mxu0 %v1169
    %1229 = vmatpush.bf16.msra.mxu0 %v1167
    %1230 = vmatpush.bf16.msra.mxu0 %v1165
    %1231 = vmatpush.bf16.msra.mxu0 %v1163
    %1232 = vmatpush.bf16.msra.mxu0 %v1161
    %1233 = vmatmul.bf16.gmra.mxu0 %v1025
    %v1234 = vpop.f32.mrf.mxu0
    %v1235 = vadd.f32 %v1061, %v1234
    %v1236 = vpop.f32.mrf.mxu0
    %1237 = vdwg.mxu0
    %1238 = vmatpush.bf16.msra.mxu0 %v1191
    %1239 = vmatpush.bf16.msra.mxu0 %v1189
    %1240 = vmatpush.bf16.msra.mxu0 %v1187
    %1241 = vmatpush.bf16.msra.mxu0 %v1185
    %1242 = vmatpush.bf16.msra.mxu0 %v1183
    %1243 = vmatpush.bf16.msra.mxu0 %v1181
    %1244 = vmatpush.bf16.msra.mxu0 %v1179
    %1245 = vmatpush.bf16.msra.mxu0 %v1177
    %1246 = vmatmul.bf16.gmra.mxu0 %v1026
    %v1247 = vpop.f32.mrf.mxu0
    %v1248 = vadd.f32 %v1235, %v1247
    %v1249 = vpop.f32.mrf.mxu0
    %1250 = vdwg.mxu0
    %1251 = vmatpush.bf16.msra.mxu0 %v1176
    %1252 = vmatpush.bf16.msra.mxu0 %v1174
    %1253 = vmatpush.bf16.msra.mxu0 %v1172
    %1254 = vmatpush.bf16.msra.mxu0 %v1170
    %1255 = vmatpush.bf16.msra.mxu0 %v1168
    %1256 = vmatpush.bf16.msra.mxu0 %v1166
    %1257 = vmatpush.bf16.msra.mxu0 %v1164
    %1258 = vmatpush.bf16.msra.mxu0 %v1162
    %1259 = vmatmul.bf16.gmra.mxu0 %v1025
    %v1260 = vpop.f32.mrf.mxu0
    %v1261 = vadd.f32 %v1062, %v1260
    %v1262 = vpop.f32.mrf.mxu0
    %1263 = vdwg.mxu0
    %1264 = vmatpush.bf16.msra.mxu0 %v1192
    %1265 = vmatpush.bf16.msra.mxu0 %v1190
    %1266 = vmatpush.bf16.msra.mxu0 %v1188
    %1267 = vmatpush.bf16.msra.mxu0 %v1186
    %1268 = vmatpush.bf16.msra.mxu0 %v1184
    %1269 = vmatpush.bf16.msra.mxu0 %v1182
    %1270 = vmatpush.bf16.msra.mxu0 %v1180
    %1271 = vmatpush.bf16.msra.mxu0 %v1178
    %1272 = vmatmul.bf16.gmra.mxu0 %v1026
    %v1273 = vpop.f32.mrf.mxu0
    %v1274 = vadd.f32 %v1261, %v1273
    %v1275 = vpop.f32.mrf.mxu0
    %1276 = vdwg.mxu0
    %v1277 = vmax.f32 %v1248, 0.0
    %v1278 = vmax.f32 %v1274, 0.0
    %v1279 = vxor.u32 %v995, 2238012522
    %v1280 = vxor.u32 %v996, 2238012522
    %v1281 = vshrl.u32 %v1279, 16
    %v1282 = vshrl.u32 %v1280, 16
    %v1283 = vxor.u32 %v1279, %v1281
    %v1284 = vxor.u32 %v1280, %v1282
    %v1285 = vmul.u32 %v1283, 2146121005
    %v1286 = vmul.u32 %v1284, 2146121005
    %v1287 = vshrl.u32 %v1285, 15
    %v1288 = vshrl.u32 %v1286, 15
    %v1289 = vxor.u32 %v1285, %v1287
    %v1290 = vxor.u32 %v1286, %v1288
    %v1291 = vmul.u32 %v1289, 2221713035
    %v1292 = vmul.u32 %v1290, 2221713035
    %v1293 = vshrl.u32 %v1291, 16
    %v1294 = vshrl.u32 %v1292, 16
    %v1295 = vxor.u32 %v1291, %v1293
    %v1296 = vxor.u32 %v1292, %v1294
    %v1297 = vadd.s32 %v1295, 2147483648
    %vm1299 = vcmp.ge.s32.totalorder %v1297, 0
    %v1300 = vadd.s32 %v1296, 2147483648
    %vm1302 = vcmp.ge.s32.totalorder %v1300, 0
    %v1303 = vmul.f32 %v1277, 2.0
    %v1304 = vmul.f32 %v1278, 2.0
    %v1305 = vsel %vm1299, %v1303, 0.0
    %v1306 = vsel %vm1302, %v1304, 0.0
    %v1307 = vpack.c.bf16 %v1305, %v1305
    %v1308 = vpack.c.bf16 %v1306, %v1306
    %v1309 = vld [vmem:[#allocation10] sm:$0xf]
    %v1310 = vld [vmem:[#allocation10 + $0x4] sm:$0xf]
    %v1311 = vld [vmem:[#allocation10 + $0x8] sm:$0xf]
    %v1312 = vld [vmem:[#allocation10 + $0xc] sm:$0xf]
    %v1313 = vld [vmem:[#allocation10 + $0x10] sm:$0xf]
    %v1314 = vld [vmem:[#allocation10 + $0x14] sm:$0xf]
    %v1315 = vld [vmem:[#allocation10 + $0x18] sm:$0xf]
    %v1316 = vld [vmem:[#allocation10 + $0x1c] sm:$0xf]
    %v1317 = vld [vmem:[#allocation10 + $0x20] sm:$0xf]
    %v1318 = vld [vmem:[#allocation10 + $0x24] sm:$0xf]
    %v1319 = vld [vmem:[#allocation10 + $0x28] sm:$0xf]
    %v1320 = vld [vmem:[#allocation10 + $0x2c] sm:$0xf]
    %v1321 = vld [vmem:[#allocation10 + $0x30] sm:$0xf]
    %v1322 = vld [vmem:[#allocation10 + $0x34] sm:$0xf]
    %v1323 = vld [vmem:[#allocation10 + $0x38] sm:$0xf]
    %v1324 = vld [vmem:[#allocation10 + $0x3c] sm:$0xf]
    %v1325 = vld [vmem:[#allocation10 + $0x40] sm:$0xf]
    %v1326 = vld [vmem:[#allocation10 + $0x44] sm:$0xf]
    %v1327 = vld [vmem:[#allocation10 + $0x48] sm:$0xf]
    %v1328 = vld [vmem:[#allocation10 + $0x4c] sm:$0xf]
    %v1329 = vld [vmem:[#allocation10 + $0x50] sm:$0xf]
    %v1330 = vld [vmem:[#allocation10 + $0x54] sm:$0xf]
    %v1331 = vld [vmem:[#allocation10 + $0x58] sm:$0xf]
    %v1332 = vld [vmem:[#allocation10 + $0x5c] sm:$0xf]
    %v1333 = vld [vmem:[#allocation10 + $0x60] sm:$0xf]
    %v1334 = vld [vmem:[#allocation10 + $0x64] sm:$0xf]
    %v1335 = vld [vmem:[#allocation10 + $0x68] sm:$0xf]
    %v1336 = vld [vmem:[#allocation10 + $0x6c] sm:$0xf]
    %v1337 = vld [vmem:[#allocation10 + $0x70] sm:$0xf]
    %v1338 = vld [vmem:[#allocation10 + $0x74] sm:$0xf]
    %v1339 = vld [vmem:[#allocation10 + $0x78] sm:$0xf]
    %v1340 = vld [vmem:[#allocation10 + $0x7c] sm:$0xf]
    %v1341 = vld [vmem:[%s7] sm:$0x1]
    %v1343 = vperm.slane %v1341, 0
    %v1377 = vunpack.c.l.b16 %v1309
    %v1378 = vunpack.c.l.b16 %v1310
    %v1379 = vunpack.c.l.b16 %v1311
    %v1380 = vunpack.c.l.b16 %v1312
    %v1381 = vunpack.c.l.b16 %v1313
    %v1382 = vunpack.c.l.b16 %v1314
    %v1383 = vunpack.c.l.b16 %v1315
    %v1384 = vunpack.c.l.b16 %v1316
    %v1385 = vunpack.c.l.b16 %v1317
    %v1386 = vunpack.c.l.b16 %v1318
    %v1387 = vunpack.c.l.b16 %v1319
    %v1388 = vunpack.c.l.b16 %v1320
    %v1389 = vunpack.c.l.b16 %v1321
    %v1390 = vunpack.c.l.b16 %v1322
    %v1391 = vunpack.c.l.b16 %v1323
    %v1392 = vunpack.c.l.b16 %v1324
    %v1393 = vunpack.c.l.b16 %v1325
    %v1394 = vunpack.c.l.b16 %v1326
    %v1395 = vunpack.c.l.b16 %v1327
    %v1396 = vunpack.c.l.b16 %v1328
    %v1397 = vunpack.c.l.b16 %v1329
    %v1398 = vunpack.c.l.b16 %v1330
    %v1399 = vunpack.c.l.b16 %v1331
    %v1400 = vunpack.c.l.b16 %v1332
    %v1401 = vunpack.c.l.b16 %v1333
    %v1402 = vunpack.c.l.b16 %v1334
    %v1403 = vunpack.c.l.b16 %v1335
    %v1404 = vunpack.c.l.b16 %v1336
    %v1405 = vunpack.c.l.b16 %v1337
    %v1406 = vunpack.c.l.b16 %v1338
    %v1407 = vunpack.c.l.b16 %v1339
    %v1408 = vunpack.c.l.b16 %v1340
    %v1409 = vpack.c.b16 %v1378, %v1377
    %v1410 = vpack.c.b16 %v1380, %v1379
    %v1411 = vpack.c.b16 %v1382, %v1381
    %v1412 = vpack.c.b16 %v1384, %v1383
    %v1413 = vpack.c.b16 %v1386, %v1385
    %v1414 = vpack.c.b16 %v1388, %v1387
    %v1415 = vpack.c.b16 %v1390, %v1389
    %v1416 = vpack.c.b16 %v1392, %v1391
    %v1417 = vpack.c.b16 %v1394, %v1393
    %v1418 = vpack.c.b16 %v1396, %v1395
    %v1419 = vpack.c.b16 %v1398, %v1397
    %v1420 = vpack.c.b16 %v1400, %v1399
    %v1421 = vpack.c.b16 %v1402, %v1401
    %v1422 = vpack.c.b16 %v1404, %v1403
    %v1423 = vpack.c.b16 %v1406, %v1405
    %v1424 = vpack.c.b16 %v1408, %v1407
    %1441 = vmatpush.bf16.msra.mxu0 %v1416
    %1442 = vmatpush.bf16.msra.mxu0 %v1415
    %1443 = vmatpush.bf16.msra.mxu0 %v1414
    %1444 = vmatpush.bf16.msra.mxu0 %v1413
    %1445 = vmatpush.bf16.msra.mxu0 %v1412
    %1446 = vmatpush.bf16.msra.mxu0 %v1411
    %1447 = vmatpush.bf16.msra.mxu0 %v1410
    %1448 = vmatpush.bf16.msra.mxu0 %v1409
    %1449 = vmatmul.bf16.gmra.mxu0 %v1307
    %v1450 = vpop.f32.mrf.mxu0
    %v1451 = vadd.f32 %v1343, %v1450
    %v1452 = vpop.f32.mrf.mxu0
    %1453 = vdwg.mxu0
    %1454 = vmatpush.bf16.msra.mxu0 %v1424
    %1455 = vmatpush.bf16.msra.mxu0 %v1423
    %1456 = vmatpush.bf16.msra.mxu0 %v1422
    %1457 = vmatpush.bf16.msra.mxu0 %v1421
    %1458 = vmatpush.bf16.msra.mxu0 %v1420
    %1459 = vmatpush.bf16.msra.mxu0 %v1419
    %1460 = vmatpush.bf16.msra.mxu0 %v1418
    %1461 = vmatpush.bf16.msra.mxu0 %v1417
    %1462 = vmatmul.bf16.gmra.mxu0 %v1308
    %v1463 = vpop.f32.mrf.mxu0
    %v1464 = vadd.f32 %v1451, %v1463
    %v1465 = vpop.f32.mrf.mxu0
    %1466 = vdwg.mxu0
    %1467 = vst [vmem:[#allocation12] sm:$0xff] %v1464
    // Predicated region
    $region46: #{tpu_custom_call.1} parent=1 // pred_check
      _
    $region47: #{tpu_custom_call.1} parent=1 // pred_check_branch
      %1469 = sbr.rel (0) target = $region49
    $region48: #{tpu_custom_call.1} parent=1 // pred_region
      %1471 = vsyncadd [#allocation6], 0
      %s1473 = sshll.u32 [#allocation12], 4
      %s1474 = int_to_ptr.vmem [resolvable:$true] %s1473
      %s1475 = sshll.u32 %s8, 4
      %s1476 = int_to_ptr.hbm [resolvable:$true] %s1475
      %1478 = dma.vmem_to_hbm [thread:$0]  %s1474, 128, %s1476, [#allocation6]
    $region49: #{tpu_custom_call.1} parent=1 // pred_fallthru
      _
    // Predicated region
    $region50: #{tpu_custom_call.1} parent=1 // pred_check
      _
    $region51: #{tpu_custom_call.1} parent=1 // pred_check_branch
      %1480 = sbr.rel (0) target = $region53
    $region52: #{tpu_custom_call.1} parent=1 // pred_region
      %1482 = dma.done [#allocation6], 128
    $region53: #{tpu_custom_call.1} parent=1 // pred_fallthru
      _
    %1483 = vsyncpa [#allocation5], 1
    %1484 = vsyncpa [#allocation8], 1
    %1485 = vsyncpa [#allocation11], 1
    %1486 = vsyncpa [#allocation6], 1

</llo_original>
